<compile_context>
chip_gen: v6e
topology: v6e:2x2x1
jax: 0.10.0
libtpu: 0.0.40
codegen_flags: <defaults>
</compile_context>

<pallas_src>
import functools
import math

import jax
import jax.numpy as jnp
import numpy as np
from jax.experimental import pallas as pl
from jax.experimental.pallas import tpu as pltpu

TN_DEFAULT = 8192  # points per grid step (lane axis); clamped down for tiny inputs


def _cdiv(a, b):
    return (a + b - 1) // b


def _round_up(a, b):
    return _cdiv(a, b) * b


def _pick_compute_dtype():
    """bf16 intermediates on v6e/v7x (native bf16 VALU/EUP); f32 on v5e and earlier."""
    try:
        kind = jax.devices()[0].device_kind.lower()
    except Exception:  # pragma: no cover
        return jnp.float32
    if ("v6" in kind) or ("v7" in kind):
        return jnp.bfloat16
    return jnp.float32


# ----------------------------- Pallas kernel -----------------------------

def _rational(x, compute_dtype):
    # Rational(3,2) approximation of ReLU, matching the PyTorch reference:
    # P = 1.1915 x^3 + 1.5957 x^2 + 0.5 x + 0.0218 ; Q = 2.383 x^2 + 1 (x^3 term zeroed).
    # Polynomials run in compute_dtype (bf16 on v6e/v7x); the divide rides the EUP slot via
    # an f32 approximate reciprocal (pl.reciprocal is an f32 op).
    p = ((1.1915 * x + 1.5957) * x + 0.5) * x + 0.0218
    q = 2.383 * (x * x) + 1.0
    r = pl.reciprocal(q.astype(jnp.float32), approx=True)
    return (p.astype(jnp.float32) * r).astype(compute_dtype)


def _mlp_kernel(n_layers, compute_dtype, sid_ref, x_ref, *refs):
    # refs = (wb_0, wb_1, ..., wb_{L-1}, out_ref)
    # x_ref : (d_in + 1, TN)  points-on-lanes; last row == 1 (folds the layer-0 bias)
    # wb_i  : (1, d_out_i, d_in_i + 1)  weight set selected by index_map via sid; last col = bias
    del sid_ref                                      # only used by the index_maps
    out_ref = refs[n_layers]
    h = x_ref[...].astype(compute_dtype)             # (d_in + 1, TN)

    # Layer 0 (+ bias) as ONE MXU matmul: keeps the binding VALU slot free.
    wb0 = refs[0][0]                                  # (d_out_0, d_in + 1)
    h = jnp.dot(wb0, h, preferred_element_type=jnp.float32)   # (d_out_0, TN) f32

    for i in range(1, n_layers):
        h = _rational(h.astype(compute_dtype), compute_dtype)
        wb = refs[i][0]                               # (d_out_i, d_in_i + 1)
        w = wb[:, :-1]
        b = wb[:, -1:].astype(jnp.float32)            # (d_out_i, 1)
        h = jnp.dot(w, h, preferred_element_type=jnp.float32) + b

    out_ref[...] = h.astype(out_ref.dtype)            # (d_out, TN), lane-dense store


def fused_mlp_pallas(point_sets_cf, wb_stacks, tn=TN_DEFAULT, compute_dtype=jnp.float32):
    """Apply S independent MLPs (same architecture, different weights) to S point sets
    in ONE pallas_call.

    point_sets_cf : list (len S) of channel-first arrays (d_in, N_s), float32
    wb_stacks     : list (len n_layers) of stacked merged weights (S, d_out_i, d_in_i + 1)
                    (bias as last column; layer 0's bias multiplies the appended ones row)
    returns       : list of (d_out, N_s) float32 arrays (channel-first)
    """
    S = len(point_sets_cf)
    n_layers = len(wb_stacks)
    d_in = point_sets_cf[0].shape[0]
    assert all(p.shape[0] == d_in for p in point_sets_cf)
    assert wb_stacks[0].shape[0] == S and wb_stacks[0].shape[2] == d_in + 1
    d_out = wb_stacks[-1].shape[1]

    n_pts = [int(p.shape[1]) for p in point_sets_cf]

    # Tile size: lane-dense (multiple of 128); don't over-pad tiny problems.
    tn = min(tn, _round_up(max(n_pts), 128))
    tiles = [_cdiv(n, tn) for n in n_pts]
    total_tiles = sum(tiles)
    total = total_tiles * tn

    # One preallocated (d_in + 1, total) buffer; row d_in is the ones row (folded layer-0 bias).
    # Per-set slabs are written with dynamic_update_slice (no pad + concat passes under jit).
    x = jnp.zeros((d_in + 1, total), jnp.float32).at[d_in, :].set(1.0)
    offs, sid, off = [], [], 0
    for s in range(S):
        x = jax.lax.dynamic_update_slice(x, point_sets_cf[s].astype(jnp.float32), (0, off))
        offs.append(off)
        sid += [s] * tiles[s]
        off += tiles[s] * tn
    sid = jnp.asarray(sid, dtype=jnp.int32)                    # (total_tiles,) -> SMEM prefetch

    # One BlockSpec per layer; the index_map picks the weight set via sid[j].
    sel_map = lambda j, sid_ref: (sid_ref[j], 0, 0)
    wb_specs = [pl.BlockSpec((1,) + wb.shape[1:], sel_map) for wb in wb_stacks]

    out = pl.pallas_call(
        functools.partial(_mlp_kernel, n_layers, compute_dtype),
        out_shape=jax.ShapeDtypeStruct((d_out, total), jnp.float32),
        grid_spec=pltpu.PrefetchScalarGridSpec(
            num_scalar_prefetch=1,
            grid=(total_tiles,),
            in_specs=[pl.BlockSpec((d_in + 1, tn), lambda j, sid_ref: (0, j))] + wb_specs,
            out_specs=pl.BlockSpec((d_out, tn), lambda j, sid_ref: (0, j)),
        ),
        compiler_params=pltpu.CompilerParams(
            dimension_semantics=("parallel",),     # shards grid across TCs on v7x
        ),
    )(sid, x, *wb_stacks)

    return [out[:, offs[s]: offs[s] + n_pts[s]] for s in range(S)]


# ----------------------------- parameter init -----------------------------

def init_mlp_params(layers, key):
    """nn.Linear-style init, torch weight layout (out_features, in_features)."""
    params = []
    for j in range(len(layers) - 1):
        key, kw, kb = jax.random.split(key, 3)
        fan_in, fan_out = layers[j], layers[j + 1]
        bound = 1.0 / math.sqrt(fan_in)
        w = jax.random.uniform(kw, (fan_out, fan_in), jnp.float32, -bound, bound)
        b = jax.random.uniform(kb, (fan_out,), jnp.float32, -bound, bound)
        params.append((w, b))
    return params


# ----------------------------- NMLK (JAX/Pallas) -----------------------------

def cartesian_prod(a, b):
    A, B = jnp.meshgrid(a, b, indexing="ij")
    return jnp.stack([A.ravel(), B.ravel()], axis=-1)


class NMLKPallas:
    def __init__(self, layers, l=13, k=3, m=7, order=2, key=None, tn=TN_DEFAULT,
                 compute_dtype=None):
        self.k = k
        self.m = m
        self.l = l
        self.n = 2 ** l + 1
        self.order = order
        self.tn = tn
        self.compute_dtype = compute_dtype if compute_dtype is not None else _pick_compute_dtype()
        if key is None:
            key = jax.random.PRNGKey(0)

        set_names = ["KHH"] + [nm for i in range(k)
                               for nm in (f"Khh_band_even_{i + 1}", f"Khh_band_odd_{i + 1}")]
        self._set_names = set_names
        self.params = {}
        for name in set_names:
            key, sub = jax.random.split(key)
            self.params[name] = init_mlp_params(layers, sub)

        # Pre-stack per-layer merged [W | b] across the 1 + 2k weight sets (set order fixed by
        # ml_kernel); cast once to the compute dtype used inside the kernel.
        n_layers = len(layers) - 1
        self.wb_stacks = []
        for li in range(n_layers):
            wb = jnp.stack([
                jnp.concatenate([self.params[nm][li][0],
                                 self.params[nm][li][1].reshape(-1, 1)], axis=1)
                for nm in set_names
            ]).astype(self.compute_dtype)                       # (S, d_out_i, d_in_i + 1)
            self.wb_stacks.append(wb)

        self._forward = jax.jit(self._forward_impl)

    # ---- grids (plain JAX glue, channel-first so no transpose/reshape passes later) ----
    def ml_grids(self, x, x_nbrs):
        n = self.n
        assert x.shape[0] == n
        # bd_coords built for API parity; Khh_bd is never computed (forward discards it).
        bd_coords = cartesian_prod(x[jnp.array([0, -1])], x)          # (2n, 2)

        # local_coords, channel-leading: (1, 2, n, 2m+1)  ==  '(n m) c -> 1 c n m'
        A, B = jnp.meshgrid(x, x_nbrs, indexing="ij")                 # (n, 2m+1)
        local_coords = jnp.stack([A, B], axis=0)[None]                # (1, 2, n, 2m+1)

        local_sets = []   # per level: [(even_cf (2,Ne), even_shape), (odd_cf (2,No), odd_shape)]
        for _ in range(self.k):
            even = local_coords[0, :, ::2, ::2]                       # (2, m_e, n_e)
            odd = local_coords[0, :, 1::2, :]                         # (2, m_o, n_o)
            local_sets.append([(even.reshape(2, -1), even.shape[1:]),
                               (odd.reshape(2, -1), odd.shape[1:])])
            # injection1d_rows: keep every other row (endpoints included)
            local_coords = local_coords[:, :, ::2, :]
        local_sets = local_sets[::-1]

        xH = local_coords[0, 0, :, 0]
        gHx, gHy = jnp.meshgrid(xH, xH, indexing="ij")
        gHH_cf = jnp.stack([gHx.ravel(), gHy.ravel()], axis=0)        # (2, nH*nH)
        gHH_shape = gHx.shape                                         # (nH, nH)
        return (gHH_cf, gHH_shape), bd_coords, local_sets

    # ---- all MLP evaluations fused into one Pallas call ----
    def ml_kernel(self, gHH, bd_coords, local_sets):
        # NOTE: Khh_bd (MLP over bd_coords) is intentionally not computed: forward() discards it.
        del bd_coords
        gHH_cf, gHH_shape = gHH
        point_sets = [gHH_cf]
        lead_shapes = [gHH_shape]
        for i in range(self.k):
            (e_cf, e_shape), (o_cf, o_shape) = local_sets[i]
            point_sets += [e_cf, o_cf]
            lead_shapes += [e_shape, o_shape]

        outs = fused_mlp_pallas(point_sets, self.wb_stacks,
                                tn=self.tn, compute_dtype=self.compute_dtype)
        d_out = outs[0].shape[0]
        outs = [o.reshape((d_out,) + tuple(sh))[None]                 # 'm n c -> 1 c m n'
                for o, sh in zip(outs, lead_shapes)]

        KHH = outs[0]
        Khh_banddiff_lst = [[outs[1 + 2 * i], outs[2 + 2 * i]] for i in range(self.k)]
        return KHH, Khh_banddiff_lst

    # ---- forward ----
    def _forward_impl(self, x, x_nbrs):
        x = (x - x[0]) / (x[-1] - x[0])
        gHH, bd_coords, local_sets = self.ml_grids(x, x_nbrs)
        Khh, Khh_banddiff_lst = self.ml_kernel(gHH, bd_coords, local_sets)
        return Khh, Khh_banddiff_lst

    def forward(self, x, x_nbrs):
        return self._forward(x, x_nbrs)


# ----------------------------- pure-JAX reference (for checking) -----------------------------

def _mlp_ref(points, params):
    h = points.astype(jnp.float32)
    for li, (w, b) in enumerate(params):
        h = h @ w.T + b
        if li != len(params) - 1:
            p = ((1.1915 * h + 1.5957) * h + 0.5) * h + 0.0218
            q = 2.383 * (h * h) + 1.0
            h = p / q
    return h


def _ref_from_cf(cf, shape, params):
    pts = jnp.moveaxis(cf.reshape((2,) + tuple(shape)), 0, -1)     # (m, n, 2)
    return jnp.moveaxis(_mlp_ref(pts, params), -1, 0)[None]        # (1, c, m, n)


# ----------------------------- main -----------------------------

if __name__ == "__main__":
    l, k, m = 5, 3, 7                 # small: n = 2^5 + 1 = 33, coarse grid nH = 5
    layers = [2, 32, 32, 1]           # input dim must be 2 (coordinate pairs)

    key = jax.random.PRNGKey(0)
    kparam, kx, knb = jax.random.split(key, 3)

    model = NMLKPallas(layers, l=l, k=k, m=m, order=2, key=kparam)

    n = 2 ** l + 1
    x = jnp.sort(jax.random.uniform(kx, (n,), dtype=jnp.float32))
    x_nbrs = jax.random.uniform(knb, (2 * m + 1,), dtype=jnp.float32)

    Khh, band_lst = model.forward(x, x_nbrs)
    jax.block_until_ready((Khh, band_lst))

    assert Khh.shape == (1, layers[-1], 2 ** (l - k) + 1, 2 ** (l - k) + 1)
    assert len(band_lst) == k

    # Cross-check against a pure-JAX f32 reference.
    # f32 kernel path: loose tol only because of the EUP approximate reciprocal.
    # bf16 kernel path (v6e/v7x): bf16 intermediates, weights and rational coefficients dominate
    # the deviation, so the parity check is necessarily looser there.
    tol = 2e-2 if model.compute_dtype == jnp.float32 else 1e-1
    xn = (x - x[0]) / (x[-1] - x[0])
    (gHH_cf, gHH_shape), _, local_sets = model.ml_grids(xn, x_nbrs)

    ref = _ref_from_cf(gHH_cf, gHH_shape, model.params["KHH"])
    np.testing.assert_allclose(np.asarray(Khh), np.asarray(ref), rtol=tol, atol=tol)
    for i in range(k):
        (e_cf, e_shape), (o_cf, o_shape) = local_sets[i]
        ref_e = _ref_from_cf(e_cf, e_shape, model.params[f"Khh_band_even_{i + 1}"])
        ref_o = _ref_from_cf(o_cf, o_shape, model.params[f"Khh_band_odd_{i + 1}"])
        np.testing.assert_allclose(np.asarray(band_lst[i][0]), np.asarray(ref_e),
                                   rtol=tol, atol=tol)
        np.testing.assert_allclose(np.asarray(band_lst[i][1]), np.asarray(ref_o),
                                   rtol=tol, atol=tol)

    print("KERNEL_OK")
</pallas_src>

<mosaic_0001>
module attributes {stable_mosaic.version = 11 : i64} {
  func.func @_mlp_kernel(%arg0: i32, %arg1: memref<7xi32, #tpu.memory_space<smem>>, %arg2: memref<3x256xf32, #tpu.memory_space<vmem>>, %arg3: memref<1x32x3xf32, #tpu.memory_space<vmem>>, %arg4: memref<1x32x33xf32, #tpu.memory_space<vmem>>, %arg5: memref<1x1x33xf32, #tpu.memory_space<vmem>>, %arg6: memref<1x256xf32, #tpu.memory_space<vmem>>) attributes {dimension_semantics = [#tpu.dimension_semantics<parallel>], iteration_bounds = array<i64: 7>, scalar_prefetch = 1 : i64, scratch_operands = 0 : i64, tpu.core_type = #tpu.core_type<tc>, window_params = [{transform_indices = @transform_0, window_bounds = array<i64: 3, 256>}, {transform_indices = @transform_1, window_bounds = array<i64: 1, 32, 3>}, {transform_indices = @transform_2, window_bounds = array<i64: 1, 32, 33>}, {transform_indices = @transform_3, window_bounds = array<i64: 1, 1, 33>}, {transform_indices = @transform_4, window_bounds = array<i64: 1, 256>}]} {
    %c0 = arith.constant 0 : index
    %c0_0 = arith.constant 0 : index
    %0 = vector.load %arg2[%c0, %c0_0] : memref<3x256xf32, #tpu.memory_space<vmem>>, vector<3x256xf32>
    %c0_1 = arith.constant 0 : index
    %c0_2 = arith.constant 0 : index
    %c0_3 = arith.constant 0 : index
    %1 = vector.load %arg3[%c0_1, %c0_2, %c0_3] : memref<1x32x3xf32, #tpu.memory_space<vmem>>, vector<1x32x3xf32>
    %2 = vector.shape_cast %1 : vector<1x32x3xf32> to vector<32x3xf32>
    %cst = arith.constant dense<0.000000e+00> : vector<32x256xf32>
    %3 = tpu.matmul %2, %0, %cst {dimension_numbers = #tpu.dot_dimension_numbers<[1], [0], [0], [1], [0, 0, 1, 1], [], []>} : vector<32x3xf32>, vector<3x256xf32>, vector<32x256xf32> -> vector<32x256xf32>
    %cst_4 = arith.constant 1.191500e+00 : f32
    %4 = vector.broadcast %cst_4 : f32 to vector<32x256xf32>
    %5 = arith.mulf %4, %3 : vector<32x256xf32>
    %cst_5 = arith.constant 1.595700e+00 : f32
    %6 = vector.broadcast %cst_5 : f32 to vector<32x256xf32>
    %7 = arith.addf %5, %6 : vector<32x256xf32>
    %8 = arith.mulf %7, %3 : vector<32x256xf32>
    %cst_6 = arith.constant 5.000000e-01 : f32
    %9 = vector.broadcast %cst_6 : f32 to vector<32x256xf32>
    %10 = arith.addf %8, %9 : vector<32x256xf32>
    %11 = arith.mulf %10, %3 : vector<32x256xf32>
    %cst_7 = arith.constant 2.180000e-02 : f32
    %12 = vector.broadcast %cst_7 : f32 to vector<32x256xf32>
    %13 = arith.addf %11, %12 : vector<32x256xf32>
    %14 = arith.mulf %3, %3 : vector<32x256xf32>
    %cst_8 = arith.constant 2.383000e+00 : f32
    %15 = vector.broadcast %cst_8 : f32 to vector<32x256xf32>
    %16 = arith.mulf %15, %14 : vector<32x256xf32>
    %cst_9 = arith.constant 1.000000e+00 : f32
    %17 = vector.broadcast %cst_9 : f32 to vector<32x256xf32>
    %18 = arith.addf %16, %17 : vector<32x256xf32>
    %19 = tpu.reciprocal %18 {approx = true} : vector<32x256xf32> -> vector<32x256xf32>
    %20 = arith.mulf %13, %19 : vector<32x256xf32>
    %c0_10 = arith.constant 0 : index
    %c0_11 = arith.constant 0 : index
    %c0_12 = arith.constant 0 : index
    %21 = vector.load %arg4[%c0_10, %c0_11, %c0_12] : memref<1x32x33xf32, #tpu.memory_space<vmem>>, vector<1x32x33xf32>
    %22 = vector.shape_cast %21 : vector<1x32x33xf32> to vector<32x33xf32>
    %23 = vector.extract_strided_slice %22 {offsets = [0, 0], sizes = [32, 32], strides = [1, 1]} : vector<32x33xf32> to vector<32x32xf32>
    %24 = vector.extract_strided_slice %22 {offsets = [0, 32], sizes = [32, 1], strides = [1, 1]} : vector<32x33xf32> to vector<32x1xf32>
    %cst_13 = arith.constant dense<0.000000e+00> : vector<32x256xf32>
    %25 = tpu.matmul %23, %20, %cst_13 {dimension_numbers = #tpu.dot_dimension_numbers<[1], [0], [0], [1], [0, 0, 1, 1], [], []>} : vector<32x32xf32>, vector<32x256xf32>, vector<32x256xf32> -> vector<32x256xf32>
    %26 = vector.broadcast %24 : vector<32x1xf32> to vector<32x256xf32>
    %27 = arith.addf %25, %26 : vector<32x256xf32>
    %cst_14 = arith.constant 1.191500e+00 : f32
    %28 = vector.broadcast %cst_14 : f32 to vector<32x256xf32>
    %29 = arith.mulf %28, %27 : vector<32x256xf32>
    %cst_15 = arith.constant 1.595700e+00 : f32
    %30 = vector.broadcast %cst_15 : f32 to vector<32x256xf32>
    %31 = arith.addf %29, %30 : vector<32x256xf32>
    %32 = arith.mulf %31, %27 : vector<32x256xf32>
    %cst_16 = arith.constant 5.000000e-01 : f32
    %33 = vector.broadcast %cst_16 : f32 to vector<32x256xf32>
    %34 = arith.addf %32, %33 : vector<32x256xf32>
    %35 = arith.mulf %34, %27 : vector<32x256xf32>
    %cst_17 = arith.constant 2.180000e-02 : f32
    %36 = vector.broadcast %cst_17 : f32 to vector<32x256xf32>
    %37 = arith.addf %35, %36 : vector<32x256xf32>
    %38 = arith.mulf %27, %27 : vector<32x256xf32>
    %cst_18 = arith.constant 2.383000e+00 : f32
    %39 = vector.broadcast %cst_18 : f32 to vector<32x256xf32>
    %40 = arith.mulf %39, %38 : vector<32x256xf32>
    %cst_19 = arith.constant 1.000000e+00 : f32
    %41 = vector.broadcast %cst_19 : f32 to vector<32x256xf32>
    %42 = arith.addf %40, %41 : vector<32x256xf32>
    %43 = tpu.reciprocal %42 {approx = true} : vector<32x256xf32> -> vector<32x256xf32>
    %44 = arith.mulf %37, %43 : vector<32x256xf32>
    %c0_20 = arith.constant 0 : index
    %c0_21 = arith.constant 0 : index
    %c0_22 = arith.constant 0 : index
    %45 = vector.load %arg5[%c0_20, %c0_21, %c0_22] : memref<1x1x33xf32, #tpu.memory_space<vmem>>, vector<1x1x33xf32>
    %46 = vector.shape_cast %45 : vector<1x1x33xf32> to vector<1x33xf32>
    %47 = vector.extract_strided_slice %46 {offsets = [0, 0], sizes = [1, 32], strides = [1, 1]} : vector<1x33xf32> to vector<1x32xf32>
    %48 = vector.extract_strided_slice %46 {offsets = [0, 32], sizes = [1, 1], strides = [1, 1]} : vector<1x33xf32> to vector<1x1xf32>
    %cst_23 = arith.constant dense<0.000000e+00> : vector<1x256xf32>
    %49 = tpu.matmul %47, %44, %cst_23 {dimension_numbers = #tpu.dot_dimension_numbers<[1], [0], [0], [1], [0, 0, 1, 1], [], []>} : vector<1x32xf32>, vector<32x256xf32>, vector<1x256xf32> -> vector<1x256xf32>
    %50 = vector.broadcast %48 : vector<1x1xf32> to vector<1x256xf32>
    %51 = arith.addf %49, %50 : vector<1x256xf32>
    %c0_24 = arith.constant 0 : index
    %c0_25 = arith.constant 0 : index
    %52 = vector.load %arg6[%c0_24, %c0_25] : memref<1x256xf32, #tpu.memory_space<vmem>>, vector<1x256xf32>
    tpu.vector_store %arg6[%c0_24, %c0_25], %51 {strides = array<i32>} : memref<1x256xf32, #tpu.memory_space<vmem>>, vector<1x256xf32>,
    return
  }
  func.func @transform_0(%arg0: i32, %arg1: memref<7xi32, #tpu.memory_space<smem>>) -> (i32, i32) {
    %c0_i32 = arith.constant 0 : i32
    %c0_i32_0 = arith.constant 0 : i32
    return %c0_i32, %arg0 : i32, i32
  }
  func.func @transform_1(%arg0: i32, %arg1: memref<7xi32, #tpu.memory_space<smem>>) -> (i32, i32, i32) {
    %0 = arith.index_cast %arg0 : i32 to index
    %1 = memref.load %arg1[%0] : memref<7xi32, #tpu.memory_space<smem>>
    %c0_i32 = arith.constant 0 : i32
    %c0_i32_0 = arith.constant 0 : i32
    %c0_i32_1 = arith.constant 0 : i32
    return %1, %c0_i32, %c0_i32_0 : i32, i32, i32
  }
  func.func @transform_2(%arg0: i32, %arg1: memref<7xi32, #tpu.memory_space<smem>>) -> (i32, i32, i32) {
    %0 = arith.index_cast %arg0 : i32 to index
    %1 = memref.load %arg1[%0] : memref<7xi32, #tpu.memory_space<smem>>
    %c0_i32 = arith.constant 0 : i32
    %c0_i32_0 = arith.constant 0 : i32
    %c0_i32_1 = arith.constant 0 : i32
    return %1, %c0_i32, %c0_i32_0 : i32, i32, i32
  }
  func.func @transform_3(%arg0: i32, %arg1: memref<7xi32, #tpu.memory_space<smem>>) -> (i32, i32, i32) {
    %0 = arith.index_cast %arg0 : i32 to index
    %1 = memref.load %arg1[%0] : memref<7xi32, #tpu.memory_space<smem>>
    %c0_i32 = arith.constant 0 : i32
    %c0_i32_0 = arith.constant 0 : i32
    %c0_i32_1 = arith.constant 0 : i32
    return %1, %c0_i32, %c0_i32_0 : i32, i32, i32
  }
  func.func @transform_4(%arg0: i32, %arg1: memref<7xi32, #tpu.memory_space<smem>>) -> (i32, i32) {
    %c0_i32 = arith.constant 0 : i32
    %c0_i32_0 = arith.constant 0 : i32
    return %c0_i32, %arg0 : i32, i32
  }
}

</mosaic_0001>

<llo_original>
// kernel: squeeze.14
$region0: #{squeeze.14}
  %s0 = inlined_call_operand.vmem [shape: f32[1,2,16,15], index: 0, kind: input, shape index: {}]
  %s1 = inlined_call_operand.vmem [shape: f32[2,240], index: 1, kind: output, shape index: {}]
  $region1: #{squeeze.14} parent=0
    #allocation0 [shape = 'u8[8192]{0}', space=vmem, size = 0x2000, scoped, tag = 'scoped mem for output reshape']
    %s2 = smov 3
    %v3 = vld [vmem:[%s0] ss:$16 sm:%s2]
    %vm4 = vcmask 121856
    %5 = vst.msk [vmem:[#allocation0] sm:$0x3] %vm4, %v3
    %s6 = scalar_lea.vmem %s0, 8
    %s7 = smov 3
    %v8 = vld [vmem:[%s6] ss:$16 sm:%s7]
    %s9 = scalar_lea.vmem %s0, 8
    %s10 = smov 3
    %v11 = vld [vmem:[%s9] ss:$16 sm:%s10]
    %vm12 = vcmask 64512
    %v13 = vsel %vm12, %v11, %v8
    %14 = vrot.lane.b32.xlu0 %v13, 120
    %v15 = vpop.permute.xlu0 %14
    %vm16 = vcmask 56320
    %s17 = scalar_lea.vmem [#allocation0], 8
    %18 = vst.msk [vmem:[%s17] sm:$0x3] %vm16, %v15
    %vm19 = vcmask 1048512
    %20 = vst.msk [vmem:[#allocation0] sm:$0x3] %vm19, %v15
    %s21 = scalar_lea.vmem %s0, 7
    %s22 = smov 3
    %v23 = vld [vmem:[%s21] ss:$16 sm:%s22]
    %24 = vrot.lane.b32.xlu0 %v23, 105
    %v25 = vpop.permute.xlu0 %24
    %vm26 = vcmask 982856
    %27 = vst.msk [vmem:[#allocation0] sm:$0x3] %vm26, %v25
    %s28 = scalar_lea.vmem %s0, 15
    %s29 = smov 3
    %v30 = vld [vmem:[%s28] ss:$16 sm:%s29]
    %31 = vrot.lane.b32.xlu0 %v30, 97
    %v32 = vpop.permute.xlu0 %31
    %vm33 = vcmask 917256
    %s34 = scalar_lea.vmem [#allocation0], 8
    %35 = vst.msk [vmem:[%s34] sm:$0x3] %vm33, %v32
    %s36 = scalar_lea.vmem %s0, 6
    %s37 = smov 3
    %v38 = vld [vmem:[%s36] ss:$16 sm:%s37]
    %39 = vrot.lane.b32.xlu0 %v38, 90
    %v40 = vpop.permute.xlu0 %39
    %vm41 = vcmask 859856
    %42 = vst.msk [vmem:[#allocation0] sm:$0x3] %vm41, %v40
    %s43 = scalar_lea.vmem %s0, 14
    %s44 = smov 3
    %v45 = vld [vmem:[%s43] ss:$16 sm:%s44]
    %46 = vrot.lane.b32.xlu0 %v45, 82
    %v47 = vpop.permute.xlu0 %46
    %vm48 = vcmask 794256
    %s49 = scalar_lea.vmem [#allocation0], 8
    %50 = vst.msk [vmem:[%s49] sm:$0x3] %vm48, %v47
    %s51 = scalar_lea.vmem %s0, 5
    %s52 = smov 3
    %v53 = vld [vmem:[%s51] ss:$16 sm:%s52]
    %54 = vrot.lane.b32.xlu0 %v53, 75
    %v55 = vpop.permute.xlu0 %54
    %vm56 = vcmask 736856
    %57 = vst.msk [vmem:[#allocation0] sm:$0x3] %vm56, %v55
    %s58 = scalar_lea.vmem %s0, 13
    %s59 = smov 3
    %v60 = vld [vmem:[%s58] ss:$16 sm:%s59]
    %61 = vrot.lane.b32.xlu0 %v60, 67
    %v62 = vpop.permute.xlu0 %61
    %vm63 = vcmask 671256
    %s64 = scalar_lea.vmem [#allocation0], 8
    %65 = vst.msk [vmem:[%s64] sm:$0x3] %vm63, %v62
    %s66 = scalar_lea.vmem %s0, 4
    %s67 = smov 3
    %v68 = vld [vmem:[%s66] ss:$16 sm:%s67]
    %69 = vrot.lane.b32.xlu0 %v68, 60
    %v70 = vpop.permute.xlu0 %69
    %vm71 = vcmask 613856
    %72 = vst.msk [vmem:[#allocation0] sm:$0x3] %vm71, %v70
    %s73 = scalar_lea.vmem %s0, 12
    %s74 = smov 3
    %v75 = vld [vmem:[%s73] ss:$16 sm:%s74]
    %76 = vrot.lane.b32.xlu0 %v75, 52
    %v77 = vpop.permute.xlu0 %76
    %vm78 = vcmask 548256
    %s79 = scalar_lea.vmem [#allocation0], 8
    %80 = vst.msk [vmem:[%s79] sm:$0x3] %vm78, %v77
    %s81 = scalar_lea.vmem %s0, 3
    %s82 = smov 3
    %v83 = vld [vmem:[%s81] ss:$16 sm:%s82]
    %84 = vrot.lane.b32.xlu0 %v83, 45
    %v85 = vpop.permute.xlu0 %84
    %vm86 = vcmask 490856
    %87 = vst.msk [vmem:[#allocation0] sm:$0x3] %vm86, %v85
    %s88 = scalar_lea.vmem %s0, 11
    %s89 = smov 3
    %v90 = vld [vmem:[%s88] ss:$16 sm:%s89]
    %91 = vrot.lane.b32.xlu0 %v90, 37
    %v92 = vpop.permute.xlu0 %91
    %vm93 = vcmask 425256
    %s94 = scalar_lea.vmem [#allocation0], 8
    %95 = vst.msk [vmem:[%s94] sm:$0x3] %vm93, %v92
    %s96 = scalar_lea.vmem %s0, 2
    %s97 = smov 3
    %v98 = vld [vmem:[%s96] ss:$16 sm:%s97]
    %99 = vrot.lane.b32.xlu0 %v98, 30
    %v100 = vpop.permute.xlu0 %99
    %vm101 = vcmask 367856
    %102 = vst.msk [vmem:[#allocation0] sm:$0x3] %vm101, %v100
    %s103 = scalar_lea.vmem %s0, 10
    %s104 = smov 3
    %v105 = vld [vmem:[%s103] ss:$16 sm:%s104]
    %106 = vrot.lane.b32.xlu0 %v105, 22
    %v107 = vpop.permute.xlu0 %106
    %vm108 = vcmask 302256
    %s109 = scalar_lea.vmem [#allocation0], 8
    %110 = vst.msk [vmem:[%s109] sm:$0x3] %vm108, %v107
    %s111 = scalar_lea.vmem %s0, 1
    %s112 = smov 3
    %v113 = vld [vmem:[%s111] ss:$16 sm:%s112]
    %114 = vrot.lane.b32.xlu0 %v113, 15
    %v115 = vpop.permute.xlu0 %114
    %vm116 = vcmask 244856
    %117 = vst.msk [vmem:[#allocation0] sm:$0x3] %vm116, %v115
    %s118 = scalar_lea.vmem %s0, 9
    %s119 = smov 3
    %v120 = vld [vmem:[%s118] ss:$16 sm:%s119]
    %121 = vrot.lane.b32.xlu0 %v120, 7
    %v122 = vpop.permute.xlu0 %121
    %vm123 = vcmask 179256
    %s124 = scalar_lea.vmem [#allocation0], 8
    %125 = vst.msk [vmem:[%s124] sm:$0x3] %vm123, %v122
    %s127 = sshll.u32 1, 2
    %s128 = ssub.s32 %s127, 1
    %v130 = vld [vmem:[#allocation0] sm:%s128]
    %s131 = sshll.u32 1, 2
    %s132 = ssub.s32 %s131, 1
    %133 = vst [vmem:[%s1] sm:%s132] %v130
    %s134 = scalar_lea.vmem [#allocation0], 8
    %v135 = vld [vmem:[%s134] sm:%s128]
    %s136 = sshll.u32 1, 2
    %s137 = ssub.s32 %s136, 1
    %s138 = scalar_lea.vmem %s1, 2
    %139 = vst [vmem:[%s138] sm:%s137] %v135

// kernel: squeeze.15
$region0: #{squeeze.15}
  %s0 = inlined_call_operand.vmem [shape: f32[1,2,9,8], index: 0, kind: input, shape index: {}]
  %s1 = inlined_call_operand.vmem [shape: f32[2,72], index: 1, kind: output, shape index: {}]
  $region1: #{squeeze.15} parent=0
    #allocation0 [shape = 'u8[4096]{0}', space=vmem, size = 0x1000, scoped, tag = 'scoped mem for output reshape']
    %s2 = smov 3
    %v3 = vld [vmem:[%s0] ss:$16 sm:%s2]
    %vm4 = vcmask 64512
    %5 = vst.msk [vmem:[#allocation0] sm:$0x3] %vm4, %v3
    %s6 = scalar_lea.vmem %s0, 8
    %s7 = smov 3
    %v8 = vld [vmem:[%s6] ss:$16 sm:%s7]
    %9 = vrot.lane.b32.xlu0 %v8, 64
    %v10 = vpop.permute.xlu0 %9
    %vm11 = vcmask 589312
    %12 = vst.msk [vmem:[#allocation0] sm:$0x3] %vm11, %v10
    %s13 = scalar_lea.vmem %s0, 7
    %s14 = smov 3
    %v15 = vld [vmem:[%s13] ss:$16 sm:%s14]
    %16 = vrot.lane.b32.xlu0 %v15, 56
    %v17 = vpop.permute.xlu0 %16
    %vm18 = vcmask 523712
    %19 = vst.msk [vmem:[#allocation0] sm:$0x3] %vm18, %v17
    %s20 = scalar_lea.vmem %s0, 6
    %s21 = smov 3
    %v22 = vld [vmem:[%s20] ss:$16 sm:%s21]
    %23 = vrot.lane.b32.xlu0 %v22, 48
    %v24 = vpop.permute.xlu0 %23
    %vm25 = vcmask 458112
    %26 = vst.msk [vmem:[#allocation0] sm:$0x3] %vm25, %v24
    %s27 = scalar_lea.vmem %s0, 5
    %s28 = smov 3
    %v29 = vld [vmem:[%s27] ss:$16 sm:%s28]
    %30 = vrot.lane.b32.xlu0 %v29, 40
    %v31 = vpop.permute.xlu0 %30
    %vm32 = vcmask 392512
    %33 = vst.msk [vmem:[#allocation0] sm:$0x3] %vm32, %v31
    %s34 = scalar_lea.vmem %s0, 4
    %s35 = smov 3
    %v36 = vld [vmem:[%s34] ss:$16 sm:%s35]
    %37 = vrot.lane.b32.xlu0 %v36, 32
    %v38 = vpop.permute.xlu0 %37
    %vm39 = vcmask 326912
    %40 = vst.msk [vmem:[#allocation0] sm:$0x3] %vm39, %v38
    %s41 = scalar_lea.vmem %s0, 3
    %s42 = smov 3
    %v43 = vld [vmem:[%s41] ss:$16 sm:%s42]
    %44 = vrot.lane.b32.xlu0 %v43, 24
    %v45 = vpop.permute.xlu0 %44
    %vm46 = vcmask 261312
    %47 = vst.msk [vmem:[#allocation0] sm:$0x3] %vm46, %v45
    %s48 = scalar_lea.vmem %s0, 2
    %s49 = smov 3
    %v50 = vld [vmem:[%s48] ss:$16 sm:%s49]
    %51 = vrot.lane.b32.xlu0 %v50, 16
    %v52 = vpop.permute.xlu0 %51
    %vm53 = vcmask 195712
    %54 = vst.msk [vmem:[#allocation0] sm:$0x3] %vm53, %v52
    %s55 = scalar_lea.vmem %s0, 1
    %s56 = smov 3
    %v57 = vld [vmem:[%s55] ss:$16 sm:%s56]
    %58 = vrot.lane.b32.xlu0 %v57, 8
    %v59 = vpop.permute.xlu0 %58
    %vm60 = vcmask 130112
    %61 = vst.msk [vmem:[#allocation0] sm:$0x3] %vm60, %v59
    %s63 = sshll.u32 1, 2
    %s64 = ssub.s32 %s63, 1
    %v66 = vld [vmem:[#allocation0] sm:%s64]
    %s67 = sshll.u32 1, 2
    %s68 = ssub.s32 %s67, 1
    %69 = vst [vmem:[%s1] sm:%s68] %v66

// kernel: squeeze.16
$region0: #{squeeze.16}
  %s0 = inlined_call_operand.vmem [shape: f32[1,2,8,15], index: 0, kind: input, shape index: {}]
  %s1 = inlined_call_operand.vmem [shape: f32[2,120], index: 1, kind: output, shape index: {}]
  $region1: #{squeeze.16} parent=0
    #allocation0 [shape = 'u8[4096]{0}', space=vmem, size = 0x1000, scoped, tag = 'scoped mem for output reshape']
    %s2 = smov 3
    %v3 = vld [vmem:[%s0] ss:$8 sm:%s2]
    %vm4 = vcmask 121856
    %5 = vst.msk [vmem:[#allocation0] sm:$0x3] %vm4, %v3
    %s6 = scalar_lea.vmem %s0, 7
    %s7 = smov 3
    %v8 = vld [vmem:[%s6] ss:$8 sm:%s7]
    %9 = vrot.lane.b32.xlu0 %v8, 105
    %v10 = vpop.permute.xlu0 %9
    %vm11 = vcmask 982856
    %12 = vst.msk [vmem:[#allocation0] sm:$0x3] %vm11, %v10
    %s13 = scalar_lea.vmem %s0, 6
    %s14 = smov 3
    %v15 = vld [vmem:[%s13] ss:$8 sm:%s14]
    %16 = vrot.lane.b32.xlu0 %v15, 90
    %v17 = vpop.permute.xlu0 %16
    %vm18 = vcmask 859856
    %19 = vst.msk [vmem:[#allocation0] sm:$0x3] %vm18, %v17
    %s20 = scalar_lea.vmem %s0, 5
    %s21 = smov 3
    %v22 = vld [vmem:[%s20] ss:$8 sm:%s21]
    %23 = vrot.lane.b32.xlu0 %v22, 75
    %v24 = vpop.permute.xlu0 %23
    %vm25 = vcmask 736856
    %26 = vst.msk [vmem:[#allocation0] sm:$0x3] %vm25, %v24
    %s27 = scalar_lea.vmem %s0, 4
    %s28 = smov 3
    %v29 = vld [vmem:[%s27] ss:$8 sm:%s28]
    %30 = vrot.lane.b32.xlu0 %v29, 60
    %v31 = vpop.permute.xlu0 %30
    %vm32 = vcmask 613856
    %33 = vst.msk [vmem:[#allocation0] sm:$0x3] %vm32, %v31
    %s34 = scalar_lea.vmem %s0, 3
    %s35 = smov 3
    %v36 = vld [vmem:[%s34] ss:$8 sm:%s35]
    %37 = vrot.lane.b32.xlu0 %v36, 45
    %v38 = vpop.permute.xlu0 %37
    %vm39 = vcmask 490856
    %40 = vst.msk [vmem:[#allocation0] sm:$0x3] %vm39, %v38
    %s41 = scalar_lea.vmem %s0, 2
    %s42 = smov 3
    %v43 = vld [vmem:[%s41] ss:$8 sm:%s42]
    %44 = vrot.lane.b32.xlu0 %v43, 30
    %v45 = vpop.permute.xlu0 %44
    %vm46 = vcmask 367856
    %47 = vst.msk [vmem:[#allocation0] sm:$0x3] %vm46, %v45
    %s48 = scalar_lea.vmem %s0, 1
    %s49 = smov 3
    %v50 = vld [vmem:[%s48] ss:$8 sm:%s49]
    %51 = vrot.lane.b32.xlu0 %v50, 15
    %v52 = vpop.permute.xlu0 %51
    %vm53 = vcmask 244856
    %54 = vst.msk [vmem:[#allocation0] sm:$0x3] %vm53, %v52
    %s56 = sshll.u32 1, 2
    %s57 = ssub.s32 %s56, 1
    %v59 = vld [vmem:[#allocation0] sm:%s57]
    %s60 = sshll.u32 1, 2
    %s61 = ssub.s32 %s60, 1
    %62 = vst [vmem:[%s1] sm:%s61] %v59

// kernel: squeeze.17
$region0: #{squeeze.17}
  %s0 = inlined_call_operand.vmem [shape: f32[1,2,5,8], index: 0, kind: input, shape index: {}]
  %s1 = inlined_call_operand.vmem [shape: f32[2,40], index: 1, kind: output, shape index: {}]
  $region1: #{squeeze.17} parent=0
    #allocation0 [shape = 'u8[4096]{0}', space=vmem, size = 0x1000, scoped, tag = 'scoped mem for output reshape']
    %s2 = smov 3
    %v3 = vld [vmem:[%s0] ss:$8 sm:%s2]
    %vm4 = vcmask 64512
    %5 = vst.msk [vmem:[#allocation0] sm:$0x3] %vm4, %v3
    %s6 = scalar_lea.vmem %s0, 4
    %s7 = smov 3
    %v8 = vld [vmem:[%s6] ss:$8 sm:%s7]
    %9 = vrot.lane.b32.xlu0 %v8, 32
    %v10 = vpop.permute.xlu0 %9
    %vm11 = vcmask 326912
    %12 = vst.msk [vmem:[#allocation0] sm:$0x3] %vm11, %v10
    %s13 = scalar_lea.vmem %s0, 3
    %s14 = smov 3
    %v15 = vld [vmem:[%s13] ss:$8 sm:%s14]
    %16 = vrot.lane.b32.xlu0 %v15, 24
    %v17 = vpop.permute.xlu0 %16
    %vm18 = vcmask 261312
    %19 = vst.msk [vmem:[#allocation0] sm:$0x3] %vm18, %v17
    %s20 = scalar_lea.vmem %s0, 2
    %s21 = smov 3
    %v22 = vld [vmem:[%s20] ss:$8 sm:%s21]
    %23 = vrot.lane.b32.xlu0 %v22, 16
    %v24 = vpop.permute.xlu0 %23
    %vm25 = vcmask 195712
    %26 = vst.msk [vmem:[#allocation0] sm:$0x3] %vm25, %v24
    %s27 = scalar_lea.vmem %s0, 1
    %s28 = smov 3
    %v29 = vld [vmem:[%s27] ss:$8 sm:%s28]
    %30 = vrot.lane.b32.xlu0 %v29, 8
    %v31 = vpop.permute.xlu0 %30
    %vm32 = vcmask 130112
    %33 = vst.msk [vmem:[#allocation0] sm:$0x3] %vm32, %v31
    %s35 = sshll.u32 1, 2
    %s36 = ssub.s32 %s35, 1
    %v38 = vld [vmem:[#allocation0] sm:%s36]
    %s39 = sshll.u32 1, 2
    %s40 = ssub.s32 %s39, 1
    %41 = vst [vmem:[%s1] sm:%s40] %v38

// kernel: squeeze.18
$region0: #{squeeze.18}
  %s0 = inlined_call_operand.vmem [shape: f32[1,2,4,15], index: 0, kind: input, shape index: {}]
  %s1 = inlined_call_operand.vmem [shape: f32[2,60], index: 1, kind: output, shape index: {}]
  $region1: #{squeeze.18} parent=0
    #allocation0 [shape = 'u8[4096]{0}', space=vmem, size = 0x1000, scoped, tag = 'scoped mem for output reshape']
    #allocation1 [shape = 'u8[8192]{0}', space=vmem, size = 0x2000, scoped, tag = 'scoped mem for input reshape']
    %s3 = sshll.u32 1, 4
    %s4 = ssub.s32 %s3, 1
    %s5 = scalar_lea.vmem %s0, 4
    %v6 = vld [vmem:[%s5] sm:%s4]
    %s7 = scalar_lea.vmem [#allocation1], 8
    %8 = vst [vmem:[%s7] sm:%s4] %v6
    %v9 = vld [vmem:[%s0] sm:%s4]
    %10 = vst [vmem:[#allocation1] sm:%s4] %v9
    %s11 = smov 3
    %v12 = vld [vmem:[#allocation1] ss:$8 sm:%s11]
    %vm13 = vcmask 121856
    %14 = vst.msk [vmem:[#allocation0] sm:$0x3] %vm13, %v12
    %s15 = scalar_lea.vmem [#allocation1], 3
    %s16 = smov 3
    %v17 = vld [vmem:[%s15] ss:$8 sm:%s16]
    %18 = vrot.lane.b32.xlu0 %v17, 45
    %v19 = vpop.permute.xlu0 %18
    %vm20 = vcmask 490856
    %21 = vst.msk [vmem:[#allocation0] sm:$0x3] %vm20, %v19
    %s22 = scalar_lea.vmem [#allocation1], 2
    %s23 = smov 3
    %v24 = vld [vmem:[%s22] ss:$8 sm:%s23]
    %25 = vrot.lane.b32.xlu0 %v24, 30
    %v26 = vpop.permute.xlu0 %25
    %vm27 = vcmask 367856
    %28 = vst.msk [vmem:[#allocation0] sm:$0x3] %vm27, %v26
    %s29 = scalar_lea.vmem [#allocation1], 1
    %s30 = smov 3
    %v31 = vld [vmem:[%s29] ss:$8 sm:%s30]
    %32 = vrot.lane.b32.xlu0 %v31, 15
    %v33 = vpop.permute.xlu0 %32
    %vm34 = vcmask 244856
    %35 = vst.msk [vmem:[#allocation0] sm:$0x3] %vm34, %v33
    %s37 = sshll.u32 1, 2
    %s38 = ssub.s32 %s37, 1
    %v40 = vld [vmem:[#allocation0] sm:%s38]
    %s41 = sshll.u32 1, 2
    %s42 = ssub.s32 %s41, 1
    %43 = vst [vmem:[%s1] sm:%s42] %v40

// kernel: squeeze.13
$region0: #{squeeze.13}
  %s0 = inlined_call_operand.vmem [shape: f32[1,2,17,8], index: 0, kind: input, shape index: {}]
  %s1 = inlined_call_operand.vmem [shape: f32[2,136], index: 1, kind: output, shape index: {}]
  $region1: #{squeeze.13} parent=0
    #allocation0 [shape = 'u8[8192]{0}', space=vmem, size = 0x2000, scoped, tag = 'scoped mem for output reshape']
    %s2 = smov 3
    %v3 = vld [vmem:[%s0] ss:$16 sm:%s2]
    %vm4 = vcmask 64512
    %5 = vst.msk [vmem:[#allocation0] ss:$8 sm:$0x3] %vm4, %v3
    %s6 = scalar_lea.vmem %s0, 24
    %s7 = smov 3
    %v8 = vld [vmem:[%s6] ss:$16 sm:%s7]
    %vm9 = vcmask 64512
    %s10 = scalar_lea.vmem [#allocation0], 1
    %11 = vst.msk [vmem:[%s10] ss:$8 sm:$0x3] %vm9, %v8
    %s12 = scalar_lea.vmem %s0, 15
    %s13 = smov 3
    %v14 = vld [vmem:[%s12] ss:$24 sm:%s13]
    %15 = vrot.lane.b32.xlu0 %v14, 120
    %v16 = vpop.permute.xlu0 %15
    %vm17 = vcmask 1048512
    %18 = vst.msk [vmem:[#allocation0] sm:$0x3] %vm17, %v16
    %s19 = scalar_lea.vmem %s0, 14
    %s20 = smov 3
    %v21 = vld [vmem:[%s19] ss:$24 sm:%s20]
    %22 = vrot.lane.b32.xlu0 %v21, 112
    %v23 = vpop.permute.xlu0 %22
    %vm24 = vcmask 982912
    %25 = vst.msk [vmem:[#allocation0] sm:$0x3] %vm24, %v23
    %s26 = scalar_lea.vmem %s0, 13
    %s27 = smov 3
    %v28 = vld [vmem:[%s26] ss:$24 sm:%s27]
    %29 = vrot.lane.b32.xlu0 %v28, 104
    %v30 = vpop.permute.xlu0 %29
    %vm31 = vcmask 917312
    %32 = vst.msk [vmem:[#allocation0] sm:$0x3] %vm31, %v30
    %s33 = scalar_lea.vmem %s0, 12
    %s34 = smov 3
    %v35 = vld [vmem:[%s33] ss:$24 sm:%s34]
    %36 = vrot.lane.b32.xlu0 %v35, 96
    %v37 = vpop.permute.xlu0 %36
    %vm38 = vcmask 851712
    %39 = vst.msk [vmem:[#allocation0] sm:$0x3] %vm38, %v37
    %s40 = scalar_lea.vmem %s0, 11
    %s41 = smov 3
    %v42 = vld [vmem:[%s40] ss:$24 sm:%s41]
    %43 = vrot.lane.b32.xlu0 %v42, 88
    %v44 = vpop.permute.xlu0 %43
    %vm45 = vcmask 786112
    %46 = vst.msk [vmem:[#allocation0] sm:$0x3] %vm45, %v44
    %s47 = scalar_lea.vmem %s0, 10
    %s48 = smov 3
    %v49 = vld [vmem:[%s47] ss:$24 sm:%s48]
    %50 = vrot.lane.b32.xlu0 %v49, 80
    %v51 = vpop.permute.xlu0 %50
    %vm52 = vcmask 720512
    %53 = vst.msk [vmem:[#allocation0] sm:$0x3] %vm52, %v51
    %s54 = scalar_lea.vmem %s0, 9
    %s55 = smov 3
    %v56 = vld [vmem:[%s54] ss:$24 sm:%s55]
    %57 = vrot.lane.b32.xlu0 %v56, 72
    %v58 = vpop.permute.xlu0 %57
    %vm59 = vcmask 654912
    %60 = vst.msk [vmem:[#allocation0] sm:$0x3] %vm59, %v58
    %s61 = scalar_lea.vmem %s0, 8
    %s62 = smov 3
    %v63 = vld [vmem:[%s61] ss:$24 sm:%s62]
    %64 = vrot.lane.b32.xlu0 %v63, 64
    %v65 = vpop.permute.xlu0 %64
    %vm66 = vcmask 589312
    %67 = vst.msk [vmem:[#allocation0] sm:$0x3] %vm66, %v65
    %s68 = scalar_lea.vmem %s0, 7
    %s69 = smov 3
    %v70 = vld [vmem:[%s68] ss:$24 sm:%s69]
    %71 = vrot.lane.b32.xlu0 %v70, 56
    %v72 = vpop.permute.xlu0 %71
    %vm73 = vcmask 523712
    %74 = vst.msk [vmem:[#allocation0] sm:$0x3] %vm73, %v72
    %s75 = scalar_lea.vmem %s0, 6
    %s76 = smov 3
    %v77 = vld [vmem:[%s75] ss:$24 sm:%s76]
    %78 = vrot.lane.b32.xlu0 %v77, 48
    %v79 = vpop.permute.xlu0 %78
    %vm80 = vcmask 458112
    %81 = vst.msk [vmem:[#allocation0] sm:$0x3] %vm80, %v79
    %s82 = scalar_lea.vmem %s0, 5
    %s83 = smov 3
    %v84 = vld [vmem:[%s82] ss:$24 sm:%s83]
    %85 = vrot.lane.b32.xlu0 %v84, 40
    %v86 = vpop.permute.xlu0 %85
    %vm87 = vcmask 392512
    %88 = vst.msk [vmem:[#allocation0] sm:$0x3] %vm87, %v86
    %s89 = scalar_lea.vmem %s0, 4
    %s90 = smov 3
    %v91 = vld [vmem:[%s89] ss:$24 sm:%s90]
    %92 = vrot.lane.b32.xlu0 %v91, 32
    %v93 = vpop.permute.xlu0 %92
    %vm94 = vcmask 326912
    %95 = vst.msk [vmem:[#allocation0] sm:$0x3] %vm94, %v93
    %s96 = scalar_lea.vmem %s0, 3
    %s97 = smov 3
    %v98 = vld [vmem:[%s96] ss:$24 sm:%s97]
    %99 = vrot.lane.b32.xlu0 %v98, 24
    %v100 = vpop.permute.xlu0 %99
    %vm101 = vcmask 261312
    %102 = vst.msk [vmem:[#allocation0] sm:$0x3] %vm101, %v100
    %s103 = scalar_lea.vmem %s0, 2
    %s104 = smov 3
    %v105 = vld [vmem:[%s103] ss:$24 sm:%s104]
    %106 = vrot.lane.b32.xlu0 %v105, 16
    %v107 = vpop.permute.xlu0 %106
    %vm108 = vcmask 195712
    %109 = vst.msk [vmem:[#allocation0] sm:$0x3] %vm108, %v107
    %s110 = scalar_lea.vmem %s0, 1
    %s111 = smov 3
    %v112 = vld [vmem:[%s110] ss:$24 sm:%s111]
    %113 = vrot.lane.b32.xlu0 %v112, 8
    %v114 = vpop.permute.xlu0 %113
    %vm115 = vcmask 130112
    %116 = vst.msk [vmem:[#allocation0] sm:$0x3] %vm115, %v114
    %s118 = sshll.u32 1, 2
    %s119 = ssub.s32 %s118, 1
    %v121 = vld [vmem:[#allocation0] sm:%s119]
    %s122 = sshll.u32 1, 2
    %s123 = ssub.s32 %s122, 1
    %124 = vst [vmem:[%s1] sm:%s123] %v121
    %s125 = scalar_lea.vmem [#allocation0], 8
    %v126 = vld [vmem:[%s125] sm:%s119]
    %s127 = sshll.u32 1, 2
    %s128 = ssub.s32 %s127, 1
    %s129 = scalar_lea.vmem %s1, 2
    %130 = vst [vmem:[%s129] sm:%s128] %v126

// kernel: _forward_impl.1
$region0: #{_forward_impl.1}
  #allocation0 [shape = 'u32[]', space=smem, size = 0x4, offset = 0x4, fixed_abs, tag = 'smem constant byte address 0x4 - core index']
  #allocation1 [shape = 'u32[144,128]{1,0:T(1,128)}', space=vmem, size = 0x12000, scoped, tag = 'internal scratch']
  #allocation2 [shape = 's32[1]{0}', space=sflag, size = 0x4, scoped, tag = 'scoped memory for _forward_impl.1']
  #allocation3 [shape = 'u8[512]{0}', space=smem, size = 0x200, scoped, tag = 'prefetched SMEM operand 0']
  %s0 = inlined_call_operand.vmem [shape: s32[7], index: 0, kind: input, shape index: {}]
  %s1 = inlined_call_operand.vmem [shape: f32[3,1792], index: 1, kind: input, shape index: {}]
  %s2 = inlined_call_operand.vmem [shape: f32[7,32,3], index: 2, kind: input, shape index: {}]
  %s3 = inlined_call_operand.vmem [shape: f32[7,32,33], index: 3, kind: input, shape index: {}]
  %s4 = inlined_call_operand.vmem [shape: f32[7,1,33], index: 4, kind: input, shape index: {}]
  %s5 = inlined_call_operand.vmem [shape: f32[1,1792], index: 5, kind: output, shape index: {}]
  %s6 = sld [smem:[#allocation0]]
  $region49: #{_forward_impl.1} parent=0
    _
  %s8 = ssub.s32 1, %s6
  %s9 = scalar_select 0, %s8, %s6
  %s10 = sshll.u32 %s0, 4
  %s11 = int_to_ptr.vmem [resolvable:$true] %s10
  %13 = dma.vmem_to_smem %s11, 16, [#allocation3], [#allocation2]
  %14 = dma.done [#allocation2], 16
  %15 = sfence
  loop: start=0, step=1, limit=9
  $region2: #{_forward_impl.1} parent=0 // loop_pre_header
    _
  $region3: #{_forward_impl.1} parent=0 // loop_header
    %s17 = sphi 0, %s21
    %p18 = scmp.ge.s32.totalorder %s17, 9
    %s27 = sphi 0, %s29
    %s30 = sphi 0, %s27
    %s31 = sphi 0, %s30
    %s47 = sphi 0, %s31
    %s55 = sphi 0, %s57
    %s58 = sphi 0, %s55
    %s59 = sphi 0, %s58
    %s75 = sphi 0, %s59
    %s83 = sphi 0, %s85
    %s86 = sphi 0, %s83
    %s87 = sphi 0, %s86
    %s103 = sphi 0, %s87
    %s111 = sphi 0, %s113
    %s114 = sphi 0, %s111
    %s115 = sphi 0, %s114
    %s131 = sphi 0, %s115
    %s137 = sphi 0, %s139
    %s140 = sphi 0, %s137
    %s141 = sphi 0, %s140
    %s157 = sphi 0, %s141
  $region4: #{_forward_impl.1} parent=0 // loop_header_branch
    %20 = sbr.rel (%p18) target = $region8
  $region5: #{_forward_impl.1} parent=0 // loop_body
    %s22 = ssub.s32 %s17, 1
    %s23 = ssub.s32 %s17, 2
    %s24 = sadd.s32 %s17, 1
    %s25 = ssub.s32 %s17, %s24
    %p26 = scmp.eq.s32.totalorder %s25, 0
    %s28 = sadd.s32 %s27, 1
    %s29 = scalar_select %p26, %s27, %s28
    %p32 = pneg %p26
    %p33 = scmp.eq.s32.totalorder %s17, 6
    %p34 = por %p32, %p33
    %p35 = scmp.ne.s32.totalorder %s27, %s30
    %p36 = scmp.eq.s32.totalorder %s17, 0
    %p37 = por %p35, %p36
    %p38 = scmp.ne.s32.totalorder %s27, %s30
    %p39 = scmp.eq.s32.totalorder %s22, 6
    %p40 = por %p38, %p39
    %p41 = scmp.ne.s32.totalorder %s30, %s31
    %p42 = scmp.eq.s32.totalorder %s22, 0
    %p43 = por %p41, %p42
    %p44 = scmp.ne.s32.totalorder %s30, %s31
    %p45 = scmp.eq.s32.totalorder %s23, 6
    %p46 = por %p44, %p45
    %p48 = scmp.ne.s32.totalorder %s31, %s47
    %p49 = scmp.eq.s32.totalorder %s23, 0
    %p50 = por %p48, %p49
    %s51 = sld [smem:[#allocation3 + %s17]]
    %s52 = sld [smem:[#allocation3 + %s24]]
    %s53 = ssub.s32 %s51, %s52
    %p54 = scmp.eq.s32.totalorder %s53, 0
    %s56 = sadd.s32 %s55, 1
    %s57 = scalar_select %p54, %s55, %s56
    %p60 = pneg %p54
    %p61 = scmp.eq.s32.totalorder %s17, 6
    %p62 = por %p60, %p61
    %p63 = scmp.ne.s32.totalorder %s55, %s58
    %p64 = scmp.eq.s32.totalorder %s17, 0
    %p65 = por %p63, %p64
    %p66 = scmp.ne.s32.totalorder %s55, %s58
    %p67 = scmp.eq.s32.totalorder %s22, 6
    %p68 = por %p66, %p67
    %p69 = scmp.ne.s32.totalorder %s58, %s59
    %p70 = scmp.eq.s32.totalorder %s22, 0
    %p71 = por %p69, %p70
    %p72 = scmp.ne.s32.totalorder %s58, %s59
    %p73 = scmp.eq.s32.totalorder %s23, 6
    %p74 = por %p72, %p73
    %p76 = scmp.ne.s32.totalorder %s59, %s75
    %p77 = scmp.eq.s32.totalorder %s23, 0
    %p78 = por %p76, %p77
    %s79 = sld [smem:[#allocation3 + %s17]]
    %s80 = sld [smem:[#allocation3 + %s24]]
    %s81 = ssub.s32 %s79, %s80
    %p82 = scmp.eq.s32.totalorder %s81, 0
    %s84 = sadd.s32 %s83, 1
    %s85 = scalar_select %p82, %s83, %s84
    %p88 = pneg %p82
    %p89 = scmp.eq.s32.totalorder %s17, 6
    %p90 = por %p88, %p89
    %p91 = scmp.ne.s32.totalorder %s83, %s86
    %p92 = scmp.eq.s32.totalorder %s17, 0
    %p93 = por %p91, %p92
    %p94 = scmp.ne.s32.totalorder %s83, %s86
    %p95 = scmp.eq.s32.totalorder %s22, 6
    %p96 = por %p94, %p95
    %p97 = scmp.ne.s32.totalorder %s86, %s87
    %p98 = scmp.eq.s32.totalorder %s22, 0
    %p99 = por %p97, %p98
    %p100 = scmp.ne.s32.totalorder %s86, %s87
    %p101 = scmp.eq.s32.totalorder %s23, 6
    %p102 = por %p100, %p101
    %p104 = scmp.ne.s32.totalorder %s87, %s103
    %p105 = scmp.eq.s32.totalorder %s23, 0
    %p106 = por %p104, %p105
    %s107 = sld [smem:[#allocation3 + %s17]]
    %s108 = sld [smem:[#allocation3 + %s24]]
    %s109 = ssub.s32 %s107, %s108
    %p110 = scmp.eq.s32.totalorder %s109, 0
    %s112 = sadd.s32 %s111, 1
    %s113 = scalar_select %p110, %s111, %s112
    %p116 = pneg %p110
    %p117 = scmp.eq.s32.totalorder %s17, 6
    %p118 = por %p116, %p117
    %p119 = scmp.ne.s32.totalorder %s111, %s114
    %p120 = scmp.eq.s32.totalorder %s17, 0
    %p121 = por %p119, %p120
    %p122 = scmp.ne.s32.totalorder %s111, %s114
    %p123 = scmp.eq.s32.totalorder %s22, 6
    %p124 = por %p122, %p123
    %p125 = scmp.ne.s32.totalorder %s114, %s115
    %p126 = scmp.eq.s32.totalorder %s22, 0
    %p127 = por %p125, %p126
    %p128 = scmp.ne.s32.totalorder %s114, %s115
    %p129 = scmp.eq.s32.totalorder %s23, 6
    %p130 = por %p128, %p129
    %p132 = scmp.ne.s32.totalorder %s115, %s131
    %p133 = scmp.eq.s32.totalorder %s23, 0
    %p134 = por %p132, %p133
    %s135 = ssub.s32 %s17, %s24
    %p136 = scmp.eq.s32.totalorder %s135, 0
    %s138 = sadd.s32 %s137, 1
    %s139 = scalar_select %p136, %s137, %s138
    %p142 = pneg %p136
    %p143 = scmp.eq.s32.totalorder %s17, 6
    %p144 = por %p142, %p143
    %p145 = scmp.ne.s32.totalorder %s137, %s140
    %p146 = scmp.eq.s32.totalorder %s17, 0
    %p147 = por %p145, %p146
    %p148 = scmp.ne.s32.totalorder %s137, %s140
    %p149 = scmp.eq.s32.totalorder %s22, 6
    %p150 = por %p148, %p149
    %p151 = scmp.ne.s32.totalorder %s140, %s141
    %p152 = scmp.eq.s32.totalorder %s22, 0
    %p153 = por %p151, %p152
    %p154 = scmp.ne.s32.totalorder %s140, %s141
    %p155 = scmp.eq.s32.totalorder %s23, 6
    %p156 = por %p154, %p155
    %p158 = scmp.ne.s32.totalorder %s141, %s157
    %p159 = scmp.eq.s32.totalorder %s23, 0
    %p160 = por %p158, %p159
    %p161 = scmp.le.s32.totalorder 1, %s17
    %p162 = scmp.lt.s32.totalorder %s17, 8
    %p163 = pnand %p161, %p162
    %p164 = pneg %p163
    // Predicated region
    $region9: #{_forward_impl.1} parent=5 // pred_check
      _
    $region10: #{_forward_impl.1} parent=5 // pred_check_branch
      %166 = sbr.rel (%p163) target = $region12
    $region11: #{_forward_impl.1} parent=5 // pred_region
      %s167 = ssub.s32 %s17, 1
    $region12: #{_forward_impl.1} parent=5 // pred_fallthru
      _
    %p168 = scmp.lt.s32.totalorder %s17, 7
    // Predicated region
    $region13: #{_forward_impl.1} parent=5 // pred_check
      %p169 = pneg %p168
    $region14: #{_forward_impl.1} parent=5 // pred_check_branch
      %171 = sbr.rel (%p169) target = $region16
    $region15: #{_forward_impl.1} parent=5 // pred_region
      // Predicated region
      $region17: #{_forward_impl.1} parent=15 // pred_check
        %p172 = pneg %p37
      $region18: #{_forward_impl.1} parent=15 // pred_check_branch
        %174 = sbr.rel (%p172) target = $region20
      $region19: #{_forward_impl.1} parent=15 // pred_region
        %s175 = smul.u32 2, %s17
        %p176 = scmp.lt.s32.totalorder %s175, 13
        %s177 = scalar_select %p176, %s175, 13
        %s178 = smul.addr %s177, 4
        %s179 = scalar_lea.vmem %s1, %s178
        %s180 = smul.u32 2, %s17
      $region20: #{_forward_impl.1} parent=15 // pred_fallthru
        _
      // Predicated region
      $region21: #{_forward_impl.1} parent=15 // pred_check
        %p181 = pneg %p65
      $region22: #{_forward_impl.1} parent=15 // pred_check_branch
        %183 = sbr.rel (%p181) target = $region24
      $region23: #{_forward_impl.1} parent=15 // pred_region
        %s184 = sld [smem:[#allocation3 + %s17]]
        %p185 = scmp.lt.s32.totalorder %s184, 6
        %s186 = scalar_select %p185, %s184, 6
        %s187 = smul.addr %s186, 4
        %s188 = smul.addr %s187, 8
        %s189 = scalar_lea.vmem %s2, %s188
        %s190 = sld [smem:[#allocation3 + %s17]]
      $region24: #{_forward_impl.1} parent=15 // pred_fallthru
        _
      // Predicated region
      $region25: #{_forward_impl.1} parent=15 // pred_check
        %p191 = pneg %p93
      $region26: #{_forward_impl.1} parent=15 // pred_check_branch
        %193 = sbr.rel (%p191) target = $region28
      $region27: #{_forward_impl.1} parent=15 // pred_region
        %s194 = sld [smem:[#allocation3 + %s17]]
        %p195 = scmp.lt.s32.totalorder %s194, 6
        %s196 = scalar_select %p195, %s194, 6
        %s197 = smul.addr %s196, 4
        %s198 = smul.addr %s197, 8
        %s199 = scalar_lea.vmem %s3, %s198
        %s200 = sld [smem:[#allocation3 + %s17]]
      $region28: #{_forward_impl.1} parent=15 // pred_fallthru
        _
      // Predicated region
      $region29: #{_forward_impl.1} parent=15 // pred_check
        %p201 = pneg %p121
      $region30: #{_forward_impl.1} parent=15 // pred_check_branch
        %203 = sbr.rel (%p201) target = $region32
      $region31: #{_forward_impl.1} parent=15 // pred_region
        %s204 = sld [smem:[#allocation3 + %s17]]
        %p205 = scmp.lt.s32.totalorder %s204, 6
        %s206 = scalar_select %p205, %s204, 6
        %s207 = scalar_lea.vmem %s4, %s206
        %s208 = sld [smem:[#allocation3 + %s17]]
      $region32: #{_forward_impl.1} parent=15 // pred_fallthru
        _
    $region16: #{_forward_impl.1} parent=5 // pred_fallthru
      _
    %p209 = scmp.le.s32.totalorder 1, %s17
    %p210 = scmp.lt.s32.totalorder %s17, 8
    %p211 = pnand %p209, %p210
    %p212 = pneg %p211
    // Predicated region
    $region33: #{_forward_impl.1} parent=5 // pred_check
      _
    $region34: #{_forward_impl.1} parent=5 // pred_check_branch
      %214 = sbr.rel (%p211) target = $region36
    $region35: #{_forward_impl.1} parent=5 // pred_region
      %s215 = ssub.s32 %s17, 1
      %s216 = smul.u32 2, %s22
      %p217 = scmp.lt.s32.totalorder %s216, 13
      %s218 = scalar_select %p217, %s216, 13
      %s219 = smul.addr %s218, 4
      %s220 = scalar_lea.vmem %s1, %s219
      %p221 = pneg %p43
      %p222 = pneg %p40
      %s223 = sld [smem:[#allocation3 + %s22]]
      %p224 = scmp.lt.s32.totalorder %s223, 6
      %s225 = scalar_select %p224, %s223, 6
      %s226 = smul.addr %s225, 4
      %s227 = smul.addr %s226, 8
      %s228 = scalar_lea.vmem %s2, %s227
      %p229 = pneg %p71
      %p230 = pneg %p68
      %s231 = sld [smem:[#allocation3 + %s22]]
      %p232 = scmp.lt.s32.totalorder %s231, 6
      %s233 = scalar_select %p232, %s231, 6
      %s234 = smul.addr %s233, 4
      %s235 = smul.addr %s234, 8
      %s236 = scalar_lea.vmem %s3, %s235
      %p237 = pneg %p99
      %p238 = pneg %p96
      %s239 = sld [smem:[#allocation3 + %s22]]
      %p240 = scmp.lt.s32.totalorder %s239, 6
      %s241 = scalar_select %p240, %s239, 6
      %s242 = scalar_lea.vmem %s4, %s241
      %p243 = pneg %p127
      %p244 = pneg %p124
      %p245 = pneg %p153
      %p246 = pneg %p150
      %s247 = smul.u32 2, %s22
      %p248 = scmp.lt.s32.totalorder %s247, 13
      %s249 = scalar_select %p248, %s247, 13
      %s250 = scalar_lea.vmem %s5, %s249
      %s251 = smul.u32 2, %s22
      %p252 = scmp.lt.s32.totalorder %s251, 13
      %s253 = scalar_select %p252, %s251, 13
      %s254 = smul.addr %s253, 4
      %s255 = scalar_lea.vmem %s1, %s254
      %s256 = smul.u32 2, %s22
      %s257 = sld [smem:[#allocation3 + %s22]]
      %p258 = scmp.lt.s32.totalorder %s257, 6
      %s259 = scalar_select %p258, %s257, 6
      %s260 = smul.addr %s259, 4
      %s261 = smul.addr %s260, 8
      %s262 = scalar_lea.vmem %s2, %s261
      %s263 = sld [smem:[#allocation3 + %s22]]
      %s264 = sld [smem:[#allocation3 + %s22]]
      %p265 = scmp.lt.s32.totalorder %s264, 6
      %s266 = scalar_select %p265, %s264, 6
      %s267 = smul.addr %s266, 4
      %s268 = smul.addr %s267, 8
      %s269 = scalar_lea.vmem %s3, %s268
      %s270 = sld [smem:[#allocation3 + %s22]]
      %s271 = sld [smem:[#allocation3 + %s22]]
      %p272 = scmp.lt.s32.totalorder %s271, 6
      %s273 = scalar_select %p272, %s271, 6
      %s274 = scalar_lea.vmem %s4, %s273
      %s275 = sld [smem:[#allocation3 + %s22]]
      %s276 = smul.u32 2, %s22
      %p277 = scmp.lt.s32.totalorder %s276, 13
      %s278 = scalar_select %p277, %s276, 13
      %s279 = scalar_lea.vmem %s5, %s278
      %s280 = smul.u32 2, %s22
      %v281 = vld [vmem:[%s255] sm:$0x77]
      %v282 = vld [vmem:[%s262] sm:$0xff]
      %v283 = vld [vmem:[%s262 + $0x8] sm:$0xff]
      %v284 = vld [vmem:[%s262 + $0x10] sm:$0xff]
      %v285 = vld [vmem:[%s262 + $0x18] sm:$0xff]
      %v287 = vcombine.high %v281, %v281
      %vm288 = vcmask 23552
      %v290 = vsel %vm288, %v282, 0
      %v293 = vsel %vm288, %v283, 0
      %v296 = vsel %vm288, %v284, 0
      %v299 = vsel %vm288, %v285, 0
      %vm301 = vcmask 1042432
      %v302 = vsel %vm301, %v281, 0
      %v304 = vsel %vm301, %v287, 0
      %306 = vmatprep.subr.mxu0 0.0
      %307 = vmatpush1.msra.mxu0 0.0
      %308 = vmatprep.subr.mxu0 0.0
      %309 = vmatpush1.msra.mxu0 0.0
      %310 = vmatprep.subr.mxu0 0.0
      %311 = vmatpush1.msra.mxu0 0.0
      %312 = vmatprep.subr.mxu0 0.0
      %313 = vmatpush1.msra.mxu0 0.0
      %314 = vmatprep.subr.mxu0 0.0
      %315 = vmatpush1.msra.mxu0 0.0
      %316 = vmatprep.subr.mxu0 0.0
      %317 = vmatpush1.msra.mxu0 0.0
      %318 = vmatprep.subr.mxu0 0.0
      %319 = vmatpush1.msra.mxu0 0.0
      %320 = vmatprep.subr.mxu0 0.0
      %321 = vmatpush1.msra.mxu0 0.0
      %322 = vmatprep.subr.mxu0 0.0
      %323 = vmatpush1.msra.mxu0 0.0
      %324 = vmatprep.subr.mxu0 0.0
      %325 = vmatpush1.msra.mxu0 0.0
      %326 = vmatprep.subr.mxu0 0.0
      %327 = vmatpush1.msra.mxu0 0.0
      %328 = vmatprep.subr.mxu0 0.0
      %329 = vmatpush1.msra.mxu0 0.0
      %330 = vmatprep.subr.mxu0 0.0
      %331 = vmatpush1.msra.mxu0 0.0
      %332 = vmatprep.subr.mxu0 0.0
      %333 = vmatpush1.msra.mxu0 0.0
      %334 = vmatprep.subr.mxu0 0.0
      %335 = vmatpush1.msra.mxu0 0.0
      %336 = vmatprep.subr.mxu0 %v304
      %337 = vmatpush1.msra.mxu0 %v302
      %338 = vmatprep.subr.mxu0 0.0
      %339 = vmatpush2.msra.mxu0 0.0
      %340 = vmatprep.subr.mxu0 0.0
      %341 = vmatpush2.msra.mxu0 0.0
      %342 = vmatprep.subr.mxu0 0.0
      %343 = vmatpush2.msra.mxu0 0.0
      %344 = vmatprep.subr.mxu0 0.0
      %345 = vmatpush2.msra.mxu0 0.0
      %346 = vmatprep.subr.mxu0 0.0
      %347 = vmatpush2.msra.mxu0 0.0
      %348 = vmatprep.subr.mxu0 0.0
      %349 = vmatpush2.msra.mxu0 0.0
      %350 = vmatprep.subr.mxu0 0.0
      %351 = vmatpush2.msra.mxu0 0.0
      %352 = vmatprep.subr.mxu0 0.0
      %353 = vmatpush2.msra.mxu0 0.0
      %354 = vmatprep.subr.mxu0 0.0
      %355 = vmatpush2.msra.mxu0 0.0
      %356 = vmatprep.subr.mxu0 0.0
      %357 = vmatpush2.msra.mxu0 0.0
      %358 = vmatprep.subr.mxu0 0.0
      %359 = vmatpush2.msra.mxu0 0.0
      %360 = vmatprep.subr.mxu0 0.0
      %361 = vmatpush2.msra.mxu0 0.0
      %362 = vmatprep.subr.mxu0 0.0
      %363 = vmatpush2.msra.mxu0 0.0
      %364 = vmatprep.subr.mxu0 0.0
      %365 = vmatpush2.msra.mxu0 0.0
      %366 = vmatprep.subr.mxu0 0.0
      %367 = vmatpush2.msra.mxu0 0.0
      %368 = vmatprep.subr.mxu0 0.0
      %369 = vmatpush2.msra.mxu0 0.0
      %370 = vmatprep.mubr.f32.mxu0 0.0
      %371 = vmatmul.mubr.f32.gmra.mxu0 %v290
      %v372 = vpop.f32.mrf.mxu0
      %v373 = vadd.f32 0.0, %v372
      %v374 = vpop.f32.mrf.mxu0
      %v375 = vadd.f32 0.0, %v374
      %376 = vmatprep.mubr.f32.mxu0 0.0
      %377 = vmatmul.mubr.f32.gmra.mxu0 %v293
      %v378 = vpop.f32.mrf.mxu0
      %v379 = vadd.f32 0.0, %v378
      %v380 = vpop.f32.mrf.mxu0
      %v381 = vadd.f32 0.0, %v380
      %382 = vmatprep.mubr.f32.mxu0 0.0
      %383 = vmatmul.mubr.f32.gmra.mxu0 %v296
      %v384 = vpop.f32.mrf.mxu0
      %v385 = vadd.f32 0.0, %v384
      %v386 = vpop.f32.mrf.mxu0
      %v387 = vadd.f32 0.0, %v386
      %388 = vmatprep.mubr.f32.mxu0 0.0
      %389 = vmatmul.mubr.f32.gmra.mxu0 %v299
      %v390 = vpop.f32.mrf.mxu0
      %v391 = vadd.f32 0.0, %v390
      %v392 = vpop.f32.mrf.mxu0
      %v393 = vadd.f32 0.0, %v392
      %394 = vdwg.mxu0
      %v395 = vmul.f32 %v373, 1.1915
      %v396 = vmul.f32 %v375, 1.1915
      %v397 = vmul.f32 %v379, 1.1915
      %v398 = vmul.f32 %v381, 1.1915
      %v399 = vmul.f32 %v385, 1.1915
      %v400 = vmul.f32 %v387, 1.1915
      %v401 = vmul.f32 %v391, 1.1915
      %v402 = vmul.f32 %v393, 1.1915
      %v403 = vadd.f32 %v395, 1.5957
      %v404 = vadd.f32 %v396, 1.5957
      %v405 = vadd.f32 %v397, 1.5957
      %v406 = vadd.f32 %v398, 1.5957
      %v407 = vadd.f32 %v399, 1.5957
      %v408 = vadd.f32 %v400, 1.5957
      %v409 = vadd.f32 %v401, 1.5957
      %v410 = vadd.f32 %v402, 1.5957
      %v411 = vmul.f32 %v403, %v373
      %v412 = vmul.f32 %v404, %v375
      %v413 = vmul.f32 %v405, %v379
      %v414 = vmul.f32 %v406, %v381
      %v415 = vmul.f32 %v407, %v385
      %v416 = vmul.f32 %v408, %v387
      %v417 = vmul.f32 %v409, %v391
      %v418 = vmul.f32 %v410, %v393
      %v419 = vadd.f32 %v411, 0.5
      %v420 = vadd.f32 %v412, 0.5
      %v421 = vadd.f32 %v413, 0.5
      %v422 = vadd.f32 %v414, 0.5
      %v423 = vadd.f32 %v415, 0.5
      %v424 = vadd.f32 %v416, 0.5
      %v425 = vadd.f32 %v417, 0.5
      %v426 = vadd.f32 %v418, 0.5
      %v427 = vmul.f32 %v419, %v373
      %v428 = vmul.f32 %v420, %v375
      %v429 = vmul.f32 %v421, %v379
      %v430 = vmul.f32 %v422, %v381
      %v431 = vmul.f32 %v423, %v385
      %v432 = vmul.f32 %v424, %v387
      %v433 = vmul.f32 %v425, %v391
      %v434 = vmul.f32 %v426, %v393
      %v435 = vadd.f32 %v427, 0.0218
      %v436 = vadd.f32 %v428, 0.0218
      %v437 = vadd.f32 %v429, 0.0218
      %v438 = vadd.f32 %v430, 0.0218
      %v439 = vadd.f32 %v431, 0.0218
      %v440 = vadd.f32 %v432, 0.0218
      %v441 = vadd.f32 %v433, 0.0218
      %v442 = vadd.f32 %v434, 0.0218
      %v443 = vmul.f32 %v373, %v373
      %v444 = vmul.f32 %v375, %v375
      %v445 = vmul.f32 %v379, %v379
      %v446 = vmul.f32 %v381, %v381
      %v447 = vmul.f32 %v385, %v385
      %v448 = vmul.f32 %v387, %v387
      %v449 = vmul.f32 %v391, %v391
      %v450 = vmul.f32 %v393, %v393
      %v451 = vmul.f32 %v443, 2.383
      %v452 = vmul.f32 %v444, 2.383
      %v453 = vmul.f32 %v445, 2.383
      %v454 = vmul.f32 %v446, 2.383
      %v455 = vmul.f32 %v447, 2.383
      %v456 = vmul.f32 %v448, 2.383
      %v457 = vmul.f32 %v449, 2.383
      %v458 = vmul.f32 %v450, 2.383
      %v459 = vadd.f32 %v451, 1.0
      %v460 = vadd.f32 %v452, 1.0
      %v461 = vadd.f32 %v453, 1.0
      %v462 = vadd.f32 %v454, 1.0
      %v463 = vadd.f32 %v455, 1.0
      %v464 = vadd.f32 %v456, 1.0
      %v465 = vadd.f32 %v457, 1.0
      %v466 = vadd.f32 %v458, 1.0
      %v467 = vrcp.pop %v459
      %v468 = vrcp.pop %v460
      %v469 = vrcp.pop %v461
      %v470 = vrcp.pop %v462
      %v471 = vrcp.pop %v463
      %v472 = vrcp.pop %v464
      %v473 = vrcp.pop %v465
      %v474 = vrcp.pop %v466
      %v475 = vmul.f32 %v435, %v467
      %v476 = vmul.f32 %v436, %v468
      %v477 = vmul.f32 %v437, %v469
      %v478 = vmul.f32 %v438, %v470
      %v479 = vmul.f32 %v439, %v471
      %v480 = vmul.f32 %v440, %v472
      %v481 = vmul.f32 %v441, %v473
      %v482 = vmul.f32 %v442, %v474
      %v483 = vld [vmem:[%s269] sm:$0xff]
      %v484 = vld [vmem:[%s269 + $0x8] sm:$0xff]
      %v485 = vld [vmem:[%s269 + $0x10] sm:$0xff]
      %v486 = vld [vmem:[%s269 + $0x18] sm:$0xff]
      %488 = vset.pattern.permute.xlu0 32
      %489 = vperm.xlu0 %488, %v483
      %v490 = vpop.permute.xlu0 %489
      %493 = vset.pattern.permute.xlu0 32
      %494 = vperm.xlu0 %493, %v484
      %v495 = vpop.permute.xlu0 %494
      %498 = vset.pattern.permute.xlu0 32
      %499 = vperm.xlu0 %498, %v485
      %v500 = vpop.permute.xlu0 %499
      %503 = vset.pattern.permute.xlu0 32
      %504 = vperm.xlu0 %503, %v486
      %v505 = vpop.permute.xlu0 %504
      %vm507 = vcmask 261120
      %v508 = vsel %vm507, %v483, 0
      %v510 = vsel %vm507, %v484, 0
      %v512 = vsel %vm507, %v485, 0
      %v514 = vsel %vm507, %v486, 0
      %516 = vmatprep.subr.mxu0 0.0
      %517 = vmatpush1.msra.mxu0 0.0
      %518 = vmatprep.subr.mxu0 0.0
      %519 = vmatpush1.msra.mxu0 0.0
      %520 = vmatprep.subr.mxu0 0.0
      %521 = vmatpush1.msra.mxu0 0.0
      %522 = vmatprep.subr.mxu0 0.0
      %523 = vmatpush1.msra.mxu0 0.0
      %524 = vmatprep.subr.mxu0 0.0
      %525 = vmatpush1.msra.mxu0 0.0
      %526 = vmatprep.subr.mxu0 0.0
      %527 = vmatpush1.msra.mxu0 0.0
      %528 = vmatprep.subr.mxu0 0.0
      %529 = vmatpush1.msra.mxu0 0.0
      %530 = vmatprep.subr.mxu0 0.0
      %531 = vmatpush1.msra.mxu0 0.0
      %532 = vmatprep.subr.mxu0 0.0
      %533 = vmatpush1.msra.mxu0 0.0
      %534 = vmatprep.subr.mxu0 0.0
      %535 = vmatpush1.msra.mxu0 0.0
      %536 = vmatprep.subr.mxu0 0.0
      %537 = vmatpush1.msra.mxu0 0.0
      %538 = vmatprep.subr.mxu0 0.0
      %539 = vmatpush1.msra.mxu0 0.0
      %540 = vmatprep.subr.mxu0 %v482
      %541 = vmatpush1.msra.mxu0 %v481
      %542 = vmatprep.subr.mxu0 %v480
      %543 = vmatpush1.msra.mxu0 %v479
      %544 = vmatprep.subr.mxu0 %v478
      %545 = vmatpush1.msra.mxu0 %v477
      %546 = vmatprep.subr.mxu0 %v476
      %547 = vmatpush1.msra.mxu0 %v475
      %548 = vmatprep.subr.mxu0 0.0
      %549 = vmatpush2.msra.mxu0 0.0
      %550 = vmatprep.subr.mxu0 0.0
      %551 = vmatpush2.msra.mxu0 0.0
      %552 = vmatprep.subr.mxu0 0.0
      %553 = vmatpush2.msra.mxu0 0.0
      %554 = vmatprep.subr.mxu0 0.0
      %555 = vmatpush2.msra.mxu0 0.0
      %556 = vmatprep.subr.mxu0 0.0
      %557 = vmatpush2.msra.mxu0 0.0
      %558 = vmatprep.subr.mxu0 0.0
      %559 = vmatpush2.msra.mxu0 0.0
      %560 = vmatprep.subr.mxu0 0.0
      %561 = vmatpush2.msra.mxu0 0.0
      %562 = vmatprep.subr.mxu0 0.0
      %563 = vmatpush2.msra.mxu0 0.0
      %564 = vmatprep.subr.mxu0 0.0
      %565 = vmatpush2.msra.mxu0 0.0
      %566 = vmatprep.subr.mxu0 0.0
      %567 = vmatpush2.msra.mxu0 0.0
      %568 = vmatprep.subr.mxu0 0.0
      %569 = vmatpush2.msra.mxu0 0.0
      %570 = vmatprep.subr.mxu0 0.0
      %571 = vmatpush2.msra.mxu0 0.0
      %572 = vmatprep.subr.mxu0 0.0
      %573 = vmatpush2.msra.mxu0 0.0
      %574 = vmatprep.subr.mxu0 0.0
      %575 = vmatpush2.msra.mxu0 0.0
      %576 = vmatprep.subr.mxu0 0.0
      %577 = vmatpush2.msra.mxu0 0.0
      %578 = vmatprep.subr.mxu0 0.0
      %579 = vmatpush2.msra.mxu0 0.0
      %580 = vmatprep.mubr.f32.mxu0 0.0
      %581 = vmatmul.mubr.f32.gmra.mxu0 %v508
      %v582 = vpop.f32.mrf.mxu0
      %v583 = vadd.f32 %v490, %v582
      %v584 = vpop.f32.mrf.mxu0
      %v585 = vadd.f32 %v490, %v584
      %586 = vmatprep.mubr.f32.mxu0 0.0
      %587 = vmatmul.mubr.f32.gmra.mxu0 %v510
      %v588 = vpop.f32.mrf.mxu0
      %v589 = vadd.f32 %v495, %v588
      %v590 = vpop.f32.mrf.mxu0
      %v591 = vadd.f32 %v495, %v590
      %592 = vmatprep.mubr.f32.mxu0 0.0
      %593 = vmatmul.mubr.f32.gmra.mxu0 %v512
      %v594 = vpop.f32.mrf.mxu0
      %v595 = vadd.f32 %v500, %v594
      %v596 = vpop.f32.mrf.mxu0
      %v597 = vadd.f32 %v500, %v596
      %598 = vmatprep.mubr.f32.mxu0 0.0
      %599 = vmatmul.mubr.f32.gmra.mxu0 %v514
      %v600 = vpop.f32.mrf.mxu0
      %v601 = vadd.f32 %v505, %v600
      %v602 = vpop.f32.mrf.mxu0
      %v603 = vadd.f32 %v505, %v602
      %604 = vdwg.mxu0
      %v605 = vmul.f32 %v583, 1.1915
      %v606 = vmul.f32 %v585, 1.1915
      %v607 = vmul.f32 %v589, 1.1915
      %v608 = vmul.f32 %v591, 1.1915
      %v609 = vmul.f32 %v595, 1.1915
      %v610 = vmul.f32 %v597, 1.1915
      %v611 = vmul.f32 %v601, 1.1915
      %v612 = vmul.f32 %v603, 1.1915
      %v613 = vadd.f32 %v605, 1.5957
      %v614 = vadd.f32 %v606, 1.5957
      %v615 = vadd.f32 %v607, 1.5957
      %v616 = vadd.f32 %v608, 1.5957
      %v617 = vadd.f32 %v609, 1.5957
      %v618 = vadd.f32 %v610, 1.5957
      %v619 = vadd.f32 %v611, 1.5957
      %v620 = vadd.f32 %v612, 1.5957
      %v621 = vmul.f32 %v613, %v583
      %v622 = vmul.f32 %v614, %v585
      %v623 = vmul.f32 %v615, %v589
      %v624 = vmul.f32 %v616, %v591
      %v625 = vmul.f32 %v617, %v595
      %v626 = vmul.f32 %v618, %v597
      %v627 = vmul.f32 %v619, %v601
      %v628 = vmul.f32 %v620, %v603
      %v629 = vadd.f32 %v621, 0.5
      %v630 = vadd.f32 %v622, 0.5
      %v631 = vadd.f32 %v623, 0.5
      %v632 = vadd.f32 %v624, 0.5
      %v633 = vadd.f32 %v625, 0.5
      %v634 = vadd.f32 %v626, 0.5
      %v635 = vadd.f32 %v627, 0.5
      %v636 = vadd.f32 %v628, 0.5
      %v637 = vmul.f32 %v629, %v583
      %v638 = vmul.f32 %v630, %v585
      %v639 = vmul.f32 %v631, %v589
      %v640 = vmul.f32 %v632, %v591
      %v641 = vmul.f32 %v633, %v595
      %v642 = vmul.f32 %v634, %v597
      %v643 = vmul.f32 %v635, %v601
      %v644 = vmul.f32 %v636, %v603
      %v645 = vadd.f32 %v637, 0.0218
      %v646 = vadd.f32 %v638, 0.0218
      %v647 = vadd.f32 %v639, 0.0218
      %v648 = vadd.f32 %v640, 0.0218
      %v649 = vadd.f32 %v641, 0.0218
      %v650 = vadd.f32 %v642, 0.0218
      %v651 = vadd.f32 %v643, 0.0218
      %v652 = vadd.f32 %v644, 0.0218
      %v653 = vmul.f32 %v583, %v583
      %v654 = vmul.f32 %v585, %v585
      %v655 = vmul.f32 %v589, %v589
      %v656 = vmul.f32 %v591, %v591
      %v657 = vmul.f32 %v595, %v595
      %v658 = vmul.f32 %v597, %v597
      %v659 = vmul.f32 %v601, %v601
      %v660 = vmul.f32 %v603, %v603
      %v661 = vmul.f32 %v653, 2.383
      %v662 = vmul.f32 %v654, 2.383
      %v663 = vmul.f32 %v655, 2.383
      %v664 = vmul.f32 %v656, 2.383
      %v665 = vmul.f32 %v657, 2.383
      %v666 = vmul.f32 %v658, 2.383
      %v667 = vmul.f32 %v659, 2.383
      %v668 = vmul.f32 %v660, 2.383
      %v669 = vadd.f32 %v661, 1.0
      %v670 = vadd.f32 %v662, 1.0
      %v671 = vadd.f32 %v663, 1.0
      %v672 = vadd.f32 %v664, 1.0
      %v673 = vadd.f32 %v665, 1.0
      %v674 = vadd.f32 %v666, 1.0
      %v675 = vadd.f32 %v667, 1.0
      %v676 = vadd.f32 %v668, 1.0
      %v677 = vrcp.pop %v669
      %v678 = vrcp.pop %v670
      %v679 = vrcp.pop %v671
      %v680 = vrcp.pop %v672
      %v681 = vrcp.pop %v673
      %v682 = vrcp.pop %v674
      %v683 = vrcp.pop %v675
      %v684 = vrcp.pop %v676
      %v685 = vmul.f32 %v645, %v677
      %v686 = vmul.f32 %v646, %v678
      %v687 = vmul.f32 %v647, %v679
      %v688 = vmul.f32 %v648, %v680
      %v689 = vmul.f32 %v649, %v681
      %v690 = vmul.f32 %v650, %v682
      %v691 = vmul.f32 %v651, %v683
      %v692 = vmul.f32 %v652, %v684
      %v693 = vld [vmem:[%s274] sm:$0x1]
      %695 = vset.pattern.permute.xlu0 32
      %696 = vperm.xlu0 %695, %v693
      %v697 = vpop.permute.xlu0 %696
      %v699 = vlaneseq
      %v700 = vshrl.u32 %v699, 7
      %v701 = vsub.s32 0, %v700
      %v702 = vrot.slane %v697, %v701
      %v703 = vsel %vm507, %v693, 0
      %705 = vmatprep.subr.mxu0 0.0
      %706 = vmatpush1.msra.mxu0 0.0
      %707 = vmatprep.subr.mxu0 0.0
      %708 = vmatpush1.msra.mxu0 0.0
      %709 = vmatprep.subr.mxu0 0.0
      %710 = vmatpush1.msra.mxu0 0.0
      %711 = vmatprep.subr.mxu0 0.0
      %712 = vmatpush1.msra.mxu0 0.0
      %713 = vmatprep.subr.mxu0 0.0
      %714 = vmatpush1.msra.mxu0 0.0
      %715 = vmatprep.subr.mxu0 0.0
      %716 = vmatpush1.msra.mxu0 0.0
      %717 = vmatprep.subr.mxu0 0.0
      %718 = vmatpush1.msra.mxu0 0.0
      %719 = vmatprep.subr.mxu0 0.0
      %720 = vmatpush1.msra.mxu0 0.0
      %721 = vmatprep.subr.mxu0 0.0
      %722 = vmatpush1.msra.mxu0 0.0
      %723 = vmatprep.subr.mxu0 0.0
      %724 = vmatpush1.msra.mxu0 0.0
      %725 = vmatprep.subr.mxu0 0.0
      %726 = vmatpush1.msra.mxu0 0.0
      %727 = vmatprep.subr.mxu0 0.0
      %728 = vmatpush1.msra.mxu0 0.0
      %729 = vmatprep.subr.mxu0 %v692
      %730 = vmatpush1.msra.mxu0 %v691
      %731 = vmatprep.subr.mxu0 %v690
      %732 = vmatpush1.msra.mxu0 %v689
      %733 = vmatprep.subr.mxu0 %v688
      %734 = vmatpush1.msra.mxu0 %v687
      %735 = vmatprep.subr.mxu0 %v686
      %736 = vmatpush1.msra.mxu0 %v685
      %737 = vmatprep.subr.mxu0 0.0
      %738 = vmatpush2.msra.mxu0 0.0
      %739 = vmatprep.subr.mxu0 0.0
      %740 = vmatpush2.msra.mxu0 0.0
      %741 = vmatprep.subr.mxu0 0.0
      %742 = vmatpush2.msra.mxu0 0.0
      %743 = vmatprep.subr.mxu0 0.0
      %744 = vmatpush2.msra.mxu0 0.0
      %745 = vmatprep.subr.mxu0 0.0
      %746 = vmatpush2.msra.mxu0 0.0
      %747 = vmatprep.subr.mxu0 0.0
      %748 = vmatpush2.msra.mxu0 0.0
      %749 = vmatprep.subr.mxu0 0.0
      %750 = vmatpush2.msra.mxu0 0.0
      %751 = vmatprep.subr.mxu0 0.0
      %752 = vmatpush2.msra.mxu0 0.0
      %753 = vmatprep.subr.mxu0 0.0
      %754 = vmatpush2.msra.mxu0 0.0
      %755 = vmatprep.subr.mxu0 0.0
      %756 = vmatpush2.msra.mxu0 0.0
      %757 = vmatprep.subr.mxu0 0.0
      %758 = vmatpush2.msra.mxu0 0.0
      %759 = vmatprep.subr.mxu0 0.0
      %760 = vmatpush2.msra.mxu0 0.0
      %761 = vmatprep.subr.mxu0 0.0
      %762 = vmatpush2.msra.mxu0 0.0
      %763 = vmatprep.subr.mxu0 0.0
      %764 = vmatpush2.msra.mxu0 0.0
      %765 = vmatprep.subr.mxu0 0.0
      %766 = vmatpush2.msra.mxu0 0.0
      %767 = vmatprep.subr.mxu0 0.0
      %768 = vmatpush2.msra.mxu0 0.0
      %769 = vmatprep.mubr.f32.mxu0 0.0
      %770 = vmatmul.mubr.f32.gmra.mxu0 %v703
      %v771 = vpop.f32.mrf.mxu0
      %v772 = vadd.f32 %v702, %v771
      %v773 = vpop.f32.mrf.mxu0
      %v774 = vadd.f32 %v702, %v773
      %775 = vdwg.mxu0
      %v778 = vcombine.low %v772, %v774
      %v780 = vunpack.c.l.s4 1966171168
      %v781 = vunpack.c.0.s8 %v780
      %v782 = vlaneseq
      %v783 = vshrl.u32 %v782, 7
      %v784 = vsub.s32 %v781, %v783
      %v785 = vrot.slane %v778, %v784
      %v787 = vunpack.c.l.s4 1966171168
      %v788 = vunpack.c.0.s8 %v787
      %v789 = vlaneseq
      %v790 = vshrl.u32 %v789, 7
      %v791 = vsub.s32 %v788, %v790
      %v792 = vrot.slane %v785, %v791
      %v794 = vlaneseq
      %vm795 = vcmp.ge.s32.totalorder %v794, 0
      %vm796 = vcmp.lt.s32.totalorder %v794, 256
      %vm797 = vmand %vm795, %vm796
      %798 = vst.msk [vmem:[%s279] sm:$0x3] %vm797, %v792
      %s799 = smul.u32 2, %s22
      %p800 = scmp.lt.s32.totalorder %s799, 13
      %s801 = scalar_select %p800, %s799, 13
      %s802 = scalar_lea.vmem %s5, %s801
      // Predicated region
      $region37: #{_forward_impl.1} parent=35 // pred_check
        %p803 = pneg %p150
      $region38: #{_forward_impl.1} parent=35 // pred_check_branch
        %805 = sbr.rel (%p803) target = $region40
      $region39: #{_forward_impl.1} parent=35 // pred_region
        %s806 = smul.u32 2, %s22
      $region40: #{_forward_impl.1} parent=35 // pred_fallthru
        _
    $region36: #{_forward_impl.1} parent=5 // pred_fallthru
      _
    %p807 = scmp.le.s32.totalorder 2, %s17
    // Predicated region
    $region41: #{_forward_impl.1} parent=5 // pred_check
      %p808 = pneg %p807
    $region42: #{_forward_impl.1} parent=5 // pred_check_branch
      %810 = sbr.rel (%p808) target = $region44
    $region43: #{_forward_impl.1} parent=5 // pred_region
      %s811 = ssub.s32 %s17, 2
      // Predicated region
      $region45: #{_forward_impl.1} parent=43 // pred_check
        %p812 = pneg %p156
      $region46: #{_forward_impl.1} parent=43 // pred_check_branch
        %814 = sbr.rel (%p812) target = $region48
      $region47: #{_forward_impl.1} parent=43 // pred_region
        %s815 = smul.u32 2, %s23
        %p816 = scmp.lt.s32.totalorder %s815, 13
        %s817 = scalar_select %p816, %s815, 13
        %s818 = scalar_lea.vmem %s5, %s817
      $region48: #{_forward_impl.1} parent=43 // pred_fallthru
        _
    $region44: #{_forward_impl.1} parent=5 // pred_fallthru
      _
  $region6: #{_forward_impl.1} parent=0 // loop_footer
    %s21 = sadd.s32 1, %s17
  $region7: #{_forward_impl.1} parent=0 // loop_footer_branch
    %16 = sbr.rel target = $region3
  $region8: #{_forward_impl.1} parent=0 // loop_exit
    _

</llo_original>
